<compile_context>
chip_gen: v7x
topology: tpu7x:2x2x1
jax: 0.10.0
libtpu: 0.0.40
codegen_flags: <defaults>
</compile_context>

<pallas_src>
import functools

import jax
import jax.numpy as jnp
from jax.experimental import pallas as pl
from jax.experimental.pallas import tpu as pltpu

LANES = 128
SUBLANES = 8


def _tensorcores_per_chip():
    """2 on v7x-style megacore chips, 1 on v5e/v6e.  Conservative on failure."""
    try:
        kind = jax.devices()[0].device_kind.lower()
    except Exception:
        return 1
    if "v7" in kind or "tpu7" in kind:
        return 2
    return 1


def _fold_to_sublanes(v):
    """(R, 128) -> (8, 128) by summing vreg row-groups.

    Uses 8 independent chunk reductions + a pairwise tree instead of one long
    serial add chain, so the fold has enough ILP to hide under the DMA.
    R must be a multiple of 8.
    """
    rows = v.shape[0]
    g = rows // SUBLANES
    v3 = v.reshape(g, SUBLANES, LANES)
    if g == 1:
        return v3[0]
    nacc = min(8, g)
    bounds = [(g * i) // nacc for i in range(nacc + 1)]
    parts = [jnp.sum(v3[bounds[i]:bounds[i + 1]], axis=0) for i in range(nacc)]
    while len(parts) > 1:
        nxt = [parts[i] + parts[i + 1] for i in range(0, len(parts) - 1, 2)]
        if len(parts) % 2:
            nxt.append(parts[-1])
        parts = nxt
    return parts[0]


def _bce_kernel(x_ref, z_ref, o_ref, *, n_rows, tile_rows):
    """BCE-with-logits elementwise + per-split running (8,128) accumulation.

    x_ref, z_ref : (tile_rows, 128) VMEM tiles (logits, targets; any float dtype)
    o_ref        : (1, 8, 128) resident f32 partial-sum block for this split
    """
    s = pl.program_id(0)          # split (one per TensorCore when core-parallel)
    j = pl.program_id(1)          # reduction step within the split
    steps = pl.num_programs(1)

    @pl.when(j == 0)
    def _():
        o_ref[...] = jnp.zeros_like(o_ref)

    x = x_ref[...].astype(jnp.float32)
    z = z_ref[...].astype(jnp.float32)
    # Numerically stable BCE-with-logits (same formulation PyTorch uses).
    loss = jnp.maximum(x, 0.0) - x * z + jnp.log1p(jnp.exp(-jnp.abs(x)))

    # Rows of the (n_rows, 128) slab still valid at the start of this tile.
    # Computed from the *unclamped* tile index so clamped duplicate tiles of an
    # uneven split see rows_left <= 0 and contribute nothing.
    tile_idx = s * steps + j
    rows_left = n_rows - tile_idx * tile_rows

    @pl.when(rows_left >= tile_rows)
    def _():  # hot path: fully valid tile, no mask work.
        o_ref[0] += _fold_to_sublanes(loss)

    @pl.when(rows_left < tile_rows)
    def _():  # cold path: partial last tile or clamped duplicate tile.
        row = jax.lax.broadcasted_iota(jnp.int32, loss.shape, 0)
        # jnp.where (select) discards NaN/Inf garbage from the OOB block region;
        # do NOT replace with multiply-by-mask.
        masked = jnp.where(row < rows_left, loss, 0.0)
        o_ref[0] += _fold_to_sublanes(masked)


def _bce_elementwise(x, z):
    x = x.astype(jnp.float32)
    z = z.astype(jnp.float32)
    return jnp.maximum(x, 0.0) - x * z + jnp.log1p(jnp.exp(-jnp.abs(x)))


def bce_with_logits_loss(inputs, targets, *, tile_rows=None, num_splits=None):
    """Mean BCE-with-logits over all elements (weight=None, reduction='mean')."""
    assert inputs.shape == targets.shape
    n = int(inputs.size)
    assert n > 0

    cores = _tensorcores_per_chip()
    if tile_rows is None:
        tile_rows = 8192 if cores > 1 else 4096
    if num_splits is None:
        num_splits = cores

    x = inputs.reshape(-1)
    z = targets.reshape(-1)

    n_rows = n // LANES
    if n_rows < SUBLANES:
        # Tiny input: a kernel launch is pure overhead.
        return jnp.sum(_bce_elementwise(x, z)) * jnp.float32(1.0 / n)

    body = n_rows * LANES
    total = jnp.float32(0.0)
    if body < n:
        # <128-element ragged tail in plain JAX (tiny slice); avoids a
        # full-array zero-pad copy of both inputs.
        total = total + jnp.sum(_bce_elementwise(x[body:], z[body:]))
        xk = x[:body].reshape(n_rows, LANES)
        zk = z[:body].reshape(n_rows, LANES)
    else:
        # Common case: free reshape, zero extra HBM traffic.
        xk = x.reshape(n_rows, LANES)
        zk = z.reshape(n_rows, LANES)

    # Tile rows: multiple of 8 sublanes, no larger than the slab's row count.
    tr = max(SUBLANES, min((tile_rows // SUBLANES) * SUBLANES,
                           (n_rows // SUBLANES) * SUBLANES))
    num_tiles = pl.cdiv(n_rows, tr)

    ns = max(1, min(num_splits, num_tiles))
    steps = pl.cdiv(num_tiles, ns)

    if ns > 1 and cores >= ns:
        # Genuinely core-sharded split (v7x): each TensorCore streams half.
        dim_sem = (getattr(pltpu, "CORE_PARALLEL", "parallel"), pltpu.ARBITRARY)
    else:
        dim_sem = ("arbitrary", "arbitrary")

    def in_map(s, j):
        # Clamp so trailing grid points of an uneven split stay in bounds;
        # their (duplicate) contribution is masked to zero inside the kernel.
        return (jnp.minimum(s * steps + j, num_tiles - 1), 0)

    kernel = functools.partial(_bce_kernel, n_rows=n_rows, tile_rows=tr)

    partials = pl.pallas_call(
        kernel,
        out_shape=jax.ShapeDtypeStruct((ns, SUBLANES, LANES), jnp.float32),
        grid_spec=pltpu.PrefetchScalarGridSpec(
            num_scalar_prefetch=0,
            grid=(ns, steps),
            in_specs=[
                pl.BlockSpec((tr, LANES), in_map),
                pl.BlockSpec((tr, LANES), in_map),
            ],
            out_specs=pl.BlockSpec((1, SUBLANES, LANES), lambda s, j: (s, 0, 0)),
        ),
        compiler_params=pltpu.CompilerParams(
            dimension_semantics=dim_sem,
            vmem_limit_bytes=32 * 1024 * 1024,
        ),
        cost_estimate=pl.CostEstimate(
            flops=5 * n, transcendentals=2 * n, bytes_accessed=8 * n),
    )(xk, zk)

    # One tiny cross-lane reduction outside the hot loop.
    return (total + jnp.sum(partials)) * jnp.float32(1.0 / n)


def _reference(inputs, targets):
    x = inputs.astype(jnp.float32)
    z = targets.astype(jnp.float32)
    loss = jnp.maximum(x, 0.0) - x * z + jnp.log1p(jnp.exp(-jnp.abs(x)))
    return jnp.mean(loss)


if __name__ == "__main__":
    key = jax.random.PRNGKey(0)
    keys = jax.random.split(key, 6)

    # Case 1: typical NCHW segmentation logits (n % 128 == 0 -> zero-copy path).
    B, C, H, W = 2, 4, 16, 16
    logits = jax.random.normal(keys[0], (B, C, H, W), dtype=jnp.float32)
    labels = jax.random.bernoulli(keys[1], 0.5, (B, C, H, W)).astype(jnp.float32)
    loss = jax.block_until_ready(bce_with_logits_loss(logits, labels))
    ref = _reference(logits, labels)
    assert jnp.allclose(loss, ref, rtol=1e-5, atol=1e-5), (loss, ref)

    # Case 2: ragged element count (partial last tile + <128-element JAX tail).
    logits2 = jax.random.normal(keys[2], (2, 3, 41, 7), dtype=jnp.float32)   # n=1722
    labels2 = jax.random.bernoulli(keys[3], 0.5, (2, 3, 41, 7)).astype(jnp.float32)
    loss2 = jax.block_until_ready(bce_with_logits_loss(logits2, labels2))
    ref2 = _reference(logits2, labels2)
    assert jnp.allclose(loss2, ref2, rtol=1e-5, atol=1e-5), (loss2, ref2)

    # Case 3: multi-tile grid with an uneven forced 2-way split
    # (exercises the clamped-duplicate-tile masking).
    logits3 = jax.random.normal(keys[4], (1, 7, 8, 128), dtype=jnp.float32)  # rows=56
    labels3 = jax.random.bernoulli(keys[5], 0.5, (1, 7, 8, 128)).astype(jnp.float32)
    loss3 = jax.block_until_ready(
        bce_with_logits_loss(logits3, labels3, tile_rows=8, num_splits=2))
    ref3 = _reference(logits3, labels3)
    assert jnp.allclose(loss3, ref3, rtol=1e-5, atol=1e-5), (loss3, ref3)

    print("KERNEL_OK")
</pallas_src>

<mosaic_0001>
module attributes {stable_mosaic.version = 11 : i64} {
  func.func @_bce_kernel(%arg0: i32, %arg1: i32, %arg2: memref<16x128xf32, #tpu.memory_space<vmem>>, %arg3: memref<16x128xf32, #tpu.memory_space<vmem>>, %arg4: memref<1x8x128xf32, #tpu.memory_space<vmem>>) attributes {dimension_semantics = [#tpu.dimension_semantics<arbitrary>, #tpu.dimension_semantics<arbitrary>], iteration_bounds = array<i64: 1, 1>, scalar_prefetch = 0 : i64, scratch_operands = 0 : i64, tpu.core_type = #tpu.core_type<tc>, window_params = [{transform_indices = @transform_0, window_bounds = array<i64: 16, 128>}, {transform_indices = @transform_1, window_bounds = array<i64: 16, 128>}, {transform_indices = @transform_2, window_bounds = array<i64: 1, 8, 128>}]} {
    %c0_i32 = arith.constant 0 : i32
    %0 = arith.cmpi eq, %arg1, %c0_i32 : i32
    %1 = arith.extui %0 : i1 to i32
    %c0_i32_0 = arith.constant 0 : i32
    %2 = arith.cmpi ne, %1, %c0_i32_0 : i32
    scf.if %2 {
      %cst_10 = arith.constant 0.000000e+00 : f32
      %25 = vector.broadcast %cst_10 : f32 to vector<1x8x128xf32>
      %c0_11 = arith.constant 0 : index
      %c0_12 = arith.constant 0 : index
      %c0_13 = arith.constant 0 : index
      %26 = vector.load %arg4[%c0_11, %c0_12, %c0_13] : memref<1x8x128xf32, #tpu.memory_space<vmem>>, vector<1x8x128xf32>
      tpu.vector_store %arg4[%c0_11, %c0_12, %c0_13], %25 {strides = array<i32>} : memref<1x8x128xf32, #tpu.memory_space<vmem>>, vector<1x8x128xf32>,
    } else {
    }
    %c0 = arith.constant 0 : index
    %c0_1 = arith.constant 0 : index
    %3 = vector.load %arg2[%c0, %c0_1] : memref<16x128xf32, #tpu.memory_space<vmem>>, vector<16x128xf32>
    %c0_2 = arith.constant 0 : index
    %c0_3 = arith.constant 0 : index
    %4 = vector.load %arg3[%c0_2, %c0_3] : memref<16x128xf32, #tpu.memory_space<vmem>>, vector<16x128xf32>
    %cst = arith.constant 0.000000e+00 : f32
    %5 = vector.broadcast %cst : f32 to vector<16x128xf32>
    %6 = arith.maximumf %3, %5 : vector<16x128xf32>
    %7 = arith.mulf %3, %4 : vector<16x128xf32>
    %8 = arith.subf %6, %7 : vector<16x128xf32>
    %9 = math.absf %3 : vector<16x128xf32>
    %cst_4 = arith.constant 0.000000e+00 : f32
    %10 = vector.broadcast %cst_4 : f32 to vector<16x128xf32>
    %11 = arith.subf %10, %9 : vector<16x128xf32>
    %12 = math.exp %11 : vector<16x128xf32>
    %13 = math.log1p %12 : vector<16x128xf32>
    %14 = arith.addf %8, %13 : vector<16x128xf32>
    %c1_i32 = arith.constant 1 : i32
    %15 = arith.muli %arg0, %c1_i32 : i32
    %16 = arith.addi %15, %arg1 : i32
    %c16_i32 = arith.constant 16 : i32
    %17 = arith.muli %16, %c16_i32 : i32
    %c16_i32_5 = arith.constant 16 : i32
    %18 = arith.subi %c16_i32_5, %17 : i32
    %c16_i32_6 = arith.constant 16 : i32
    %19 = arith.cmpi sge, %18, %c16_i32_6 : i32
    %20 = arith.extui %19 : i1 to i32
    %c0_i32_7 = arith.constant 0 : i32
    %21 = arith.cmpi ne, %20, %c0_i32_7 : i32
    scf.if %21 {
      %c0_10 = arith.constant 0 : index
      %c0_11 = arith.constant 0 : index
      %c0_12 = arith.constant 0 : index
      %25 = vector.load %arg4[%c0_10, %c0_11, %c0_12] : memref<1x8x128xf32, #tpu.memory_space<vmem>>, vector<1x8x128xf32>
      %26 = vector.shape_cast %25 : vector<1x8x128xf32> to vector<8x128xf32>
      %27 = vector.shape_cast %14 : vector<16x128xf32> to vector<2x8x128xf32>
      %28 = vector.extract_strided_slice %27 {offsets = [0, 0, 0], sizes = [1, 8, 128], strides = [1, 1, 1]} : vector<2x8x128xf32> to vector<1x8x128xf32>
      %cst_13 = arith.constant dense<0.000000e+00> : vector<8x128xf32>
      %29 = vector.multi_reduction <add>, %28, %cst_13 [0] : vector<1x8x128xf32> to vector<8x128xf32>
      %30 = vector.extract_strided_slice %27 {offsets = [1, 0, 0], sizes = [1, 8, 128], strides = [1, 1, 1]} : vector<2x8x128xf32> to vector<1x8x128xf32>
      %cst_14 = arith.constant dense<0.000000e+00> : vector<8x128xf32>
      %31 = vector.multi_reduction <add>, %30, %cst_14 [0] : vector<1x8x128xf32> to vector<8x128xf32>
      %32 = arith.addf %29, %31 : vector<8x128xf32>
      %33 = arith.addf %26, %32 : vector<8x128xf32>
      %c0_15 = arith.constant 0 : index
      %c0_16 = arith.constant 0 : index
      %c0_17 = arith.constant 0 : index
      %34 = vector.load %arg4[%c0_15, %c0_16, %c0_17] : memref<1x8x128xf32, #tpu.memory_space<vmem>>, vector<1x8x128xf32>
      %35 = vector.shape_cast %34 : vector<1x8x128xf32> to vector<8x128xf32>
      %36 = vector.shape_cast %33 : vector<8x128xf32> to vector<1x8x128xf32>
      tpu.vector_store %arg4[%c0_15, %c0_16, %c0_17], %36 {strides = array<i32>} : memref<1x8x128xf32, #tpu.memory_space<vmem>>, vector<1x8x128xf32>,
    } else {
    }
    %c16_i32_8 = arith.constant 16 : i32
    %22 = arith.cmpi slt, %18, %c16_i32_8 : i32
    %23 = arith.extui %22 : i1 to i32
    %c0_i32_9 = arith.constant 0 : i32
    %24 = arith.cmpi ne, %23, %c0_i32_9 : i32
    scf.if %24 {
      %25 = tpu.iota {dimensions = array<i32: 0>} : vector<16x128xi32>
      %26 = vector.broadcast %18 : i32 to vector<16x128xi32>
      %27 = arith.cmpi slt, %25, %26 : vector<16x128xi32>
      %cst_10 = arith.constant 0.000000e+00 : f32
      %28 = vector.broadcast %cst_10 : f32 to vector<16x128xf32>
      %29 = arith.select %27, %14, %28 : vector<16x128xi1>, vector<16x128xf32>
      %c0_11 = arith.constant 0 : index
      %c0_12 = arith.constant 0 : index
      %c0_13 = arith.constant 0 : index
      %30 = vector.load %arg4[%c0_11, %c0_12, %c0_13] : memref<1x8x128xf32, #tpu.memory_space<vmem>>, vector<1x8x128xf32>
      %31 = vector.shape_cast %30 : vector<1x8x128xf32> to vector<8x128xf32>
      %32 = vector.shape_cast %29 : vector<16x128xf32> to vector<2x8x128xf32>
      %33 = vector.extract_strided_slice %32 {offsets = [0, 0, 0], sizes = [1, 8, 128], strides = [1, 1, 1]} : vector<2x8x128xf32> to vector<1x8x128xf32>
      %cst_14 = arith.constant dense<0.000000e+00> : vector<8x128xf32>
      %34 = vector.multi_reduction <add>, %33, %cst_14 [0] : vector<1x8x128xf32> to vector<8x128xf32>
      %35 = vector.extract_strided_slice %32 {offsets = [1, 0, 0], sizes = [1, 8, 128], strides = [1, 1, 1]} : vector<2x8x128xf32> to vector<1x8x128xf32>
      %cst_15 = arith.constant dense<0.000000e+00> : vector<8x128xf32>
      %36 = vector.multi_reduction <add>, %35, %cst_15 [0] : vector<1x8x128xf32> to vector<8x128xf32>
      %37 = arith.addf %34, %36 : vector<8x128xf32>
      %38 = arith.addf %31, %37 : vector<8x128xf32>
      %c0_16 = arith.constant 0 : index
      %c0_17 = arith.constant 0 : index
      %c0_18 = arith.constant 0 : index
      %39 = vector.load %arg4[%c0_16, %c0_17, %c0_18] : memref<1x8x128xf32, #tpu.memory_space<vmem>>, vector<1x8x128xf32>
      %40 = vector.shape_cast %39 : vector<1x8x128xf32> to vector<8x128xf32>
      %41 = vector.shape_cast %38 : vector<8x128xf32> to vector<1x8x128xf32>
      tpu.vector_store %arg4[%c0_16, %c0_17, %c0_18], %41 {strides = array<i32>} : memref<1x8x128xf32, #tpu.memory_space<vmem>>, vector<1x8x128xf32>,
    } else {
    }
    return
  }
  func.func @transform_0(%arg0: i32, %arg1: i32) -> (i32, i32) {
    %c1_i32 = arith.constant 1 : i32
    %0 = arith.muli %arg0, %c1_i32 : i32
    %1 = arith.addi %0, %arg1 : i32
    %c0_i32 = arith.constant 0 : i32
    %2 = arith.minsi %1, %c0_i32 : i32
    %c0_i32_0 = arith.constant 0 : i32
    %c0_i32_1 = arith.constant 0 : i32
    return %2, %c0_i32_0 : i32, i32
  }
  func.func @transform_1(%arg0: i32, %arg1: i32) -> (i32, i32) {
    %c1_i32 = arith.constant 1 : i32
    %0 = arith.muli %arg0, %c1_i32 : i32
    %1 = arith.addi %0, %arg1 : i32
    %c0_i32 = arith.constant 0 : i32
    %2 = arith.minsi %1, %c0_i32 : i32
    %c0_i32_0 = arith.constant 0 : i32
    %c0_i32_1 = arith.constant 0 : i32
    return %2, %c0_i32_0 : i32, i32
  }
  func.func @transform_2(%arg0: i32, %arg1: i32) -> (i32, i32, i32) {
    %c0_i32 = arith.constant 0 : i32
    %c0_i32_0 = arith.constant 0 : i32
    %c0_i32_1 = arith.constant 0 : i32
    return %arg0, %c0_i32, %c0_i32_0 : i32, i32, i32
  }
}

</mosaic_0001>

<llo_original>
// kernel: tpu_custom_call.1
$region0: #{tpu_custom_call.1}
  #allocation0 [shape = 'u32[]', space=smem, size = 0x4, offset = 0x4, fixed_abs, tag = 'smem constant byte address 0x4 - core index']
  #allocation1 [shape = 'u32[144,128]{1,0:T(1,128)}', space=vmem, size = 0x12000, scoped, tag = 'internal scratch']
  %s0 = inlined_call_operand.hbm [shape: f32[16,128], index: 0, kind: input, shape index: {}]
  %s1 = inlined_call_operand.hbm [shape: f32[16,128], index: 1, kind: input, shape index: {}]
  %s2 = inlined_call_operand.hbm [shape: f32[1,8,128], index: 2, kind: output, shape index: {}]
  %s3 = sld [smem:[#allocation0]]
  $region38: #{tpu_custom_call.1} parent=0
    _
  %s5 = ssub.s32 1, %s3
  %s6 = scalar_select 0, %s5, %s3
  $region1: #{tpu_custom_call.1} parent=0
    #allocation2 [shape = 'u8[8192]{0}', space=vmem, size = 0x2000, scoped, tag = 'input window, operand 0, single buffered']
    #allocation3 [shape = 's32[1]{0}', space=sflag, size = 0x4, scoped, tag = 'scoped memory for tpu_custom_call.1']
    #allocation4 [shape = 's32[1]{0}', space=sflag, size = 0x4, scoped, tag = 'scoped memory for tpu_custom_call.1']
    #allocation5 [shape = 'u8[8192]{0}', space=vmem, size = 0x2000, scoped, tag = 'input window, operand 1, single buffered']
    #allocation6 [shape = 's32[1]{0}', space=sflag, size = 0x4, scoped, tag = 'scoped memory for tpu_custom_call.1']
    #allocation7 [shape = 'u8[4096]{0}', space=vmem, size = 0x1000, scoped, tag = 'output window, operand 0, single buffered']
    %7 = vsyncpa [#allocation3], 0
    %8 = vsyncpa [#allocation6], 0
    %9 = vsyncpa [#allocation4], 0
    // Predicated region
    $region2: #{tpu_custom_call.1} parent=1 // pred_check
      _
    $region3: #{tpu_custom_call.1} parent=1 // pred_check_branch
      %11 = sbr.rel (0) target = $region5
    $region4: #{tpu_custom_call.1} parent=1 // pred_region
      %s12 = sadd.s32 0, 0
      %p13 = scmp.lt.s32.totalorder %s12, 0
      %s14 = scalar_select %p13, %s12, 0
      %s15 = smul.u32 2, %s14
      %s17 = ssub.s32 256, 256
      %18 = vsyncadd [#allocation3], %s17
      %s19 = smul.addr %s15, 128
      %s20 = scalar_lea.hbm %s0, %s19
      %s21 = sshll.u32 [#allocation2], 4
      %s22 = int_to_ptr.vmem [resolvable:$true] %s21
      %27 = dma.hbm_to_vmem [thread:$0]  %s20, 256, %s22, [#allocation3], 128, 128, 8
    $region5: #{tpu_custom_call.1} parent=1 // pred_fallthru
      _
    // Predicated region
    $region6: #{tpu_custom_call.1} parent=1 // pred_check
      _
    $region7: #{tpu_custom_call.1} parent=1 // pred_check_branch
      %29 = sbr.rel (0) target = $region9
    $region8: #{tpu_custom_call.1} parent=1 // pred_region
      %s30 = sadd.s32 0, 0
      %p31 = scmp.lt.s32.totalorder %s30, 0
      %s32 = scalar_select %p31, %s30, 0
      %s33 = smul.u32 2, %s32
      %s35 = ssub.s32 256, 256
      %36 = vsyncadd [#allocation6], %s35
      %s37 = smul.addr %s33, 128
      %s38 = scalar_lea.hbm %s1, %s37
      %s39 = sshll.u32 [#allocation5], 4
      %s40 = int_to_ptr.vmem [resolvable:$true] %s39
      %45 = dma.hbm_to_vmem [thread:$0]  %s38, 256, %s40, [#allocation6], 128, 128, 8
    $region9: #{tpu_custom_call.1} parent=1 // pred_fallthru
      _
    // Predicated region
    $region10: #{tpu_custom_call.1} parent=1 // pred_check
      _
    $region11: #{tpu_custom_call.1} parent=1 // pred_check_branch
      %47 = sbr.rel (0) target = $region13
    $region12: #{tpu_custom_call.1} parent=1 // pred_region
      %48 = dma.done [#allocation3], 256
    $region13: #{tpu_custom_call.1} parent=1 // pred_fallthru
      _
    // Predicated region
    $region14: #{tpu_custom_call.1} parent=1 // pred_check
      _
    $region15: #{tpu_custom_call.1} parent=1 // pred_check_branch
      %50 = sbr.rel (0) target = $region17
    $region16: #{tpu_custom_call.1} parent=1 // pred_region
      %51 = dma.done [#allocation6], 256
    $region17: #{tpu_custom_call.1} parent=1 // pred_fallthru
      _
    %s52 = sadd.s32 0, 0
    %p53 = scmp.lt.s32.totalorder %s52, 0
    %s54 = scalar_select %p53, %s52, 0
    %s55 = smul.u32 2, %s54
    %s56 = sadd.s32 0, 0
    %p57 = scmp.lt.s32.totalorder %s56, 0
    %s58 = scalar_select %p57, %s56, 0
    %s59 = smul.u32 2, %s58
    %p60 = scmp.eq.s32.totalorder 0, 0
    // Predicated region
    $region18: #{tpu_custom_call.1} parent=1 // pred_check
      %p61 = pneg %p60
    $region19: #{tpu_custom_call.1} parent=1 // pred_check_branch
      %63 = sbr.rel (%p61) target = $region21
    $region20: #{tpu_custom_call.1} parent=1 // pred_region
      %64 = vst [vmem:[#allocation7] sm:$0xff] 0.0
    $region21: #{tpu_custom_call.1} parent=1 // pred_fallthru
      _
    %v65 = vld [vmem:[#allocation2] sm:$0xff]
    %v66 = vld [vmem:[#allocation2 + $0x8] sm:$0xff]
    %v67 = vld [vmem:[#allocation5] sm:$0xff]
    %v68 = vld [vmem:[#allocation5 + $0x8] sm:$0xff]
    %v69 = vmax.f32 %v65, 0.0
    %v70 = vmax.f32 %v66, 0.0
    %v71 = vmul.f32 %v65, %v67
    %v72 = vmul.f32 %v66, %v68
    %v73 = vsub.f32 %v69, %v71
    %v74 = vsub.f32 %v70, %v72
    %v75 = vand.u32 2147483647, %v65
    %v76 = vand.u32 2147483647, %v66
    %v77 = vsub.f32 0.0, %v75
    %v78 = vsub.f32 0.0, %v76
    %v79 = vmul.f32 %v77, 1.442695
    %v80 = vpow.pop %v79
    %v81 = vmul.f32 %v78, 1.442695
    %v82 = vpow.pop %v81
    %v83 = vadd.f32 %v80, 1.0
    %v84 = vlog2.pop %v83
    %v85 = vmul.f32 %v84, 0.6931472
    %v86 = vmul.f32 -0.5, %v80
    %v87 = vadd.f32 %v86, 1.0
    %v88 = vmul.f32 %v87, %v80
    %v89 = vand.u32 2147483647, %v80
    %vm90 = vcmp.lt.f32.partialorder %v89, 0.0004427343
    %v91 = vsel %vm90, %v88, %v85
    %v92 = vadd.f32 %v82, 1.0
    %v93 = vlog2.pop %v92
    %v94 = vmul.f32 %v93, 0.6931472
    %v95 = vmul.f32 -0.5, %v82
    %v96 = vadd.f32 %v95, 1.0
    %v97 = vmul.f32 %v96, %v82
    %v98 = vand.u32 2147483647, %v82
    %vm99 = vcmp.lt.f32.partialorder %v98, 0.0004427343
    %v100 = vsel %vm99, %v97, %v94
    %v101 = vadd.f32 %v73, %v91
    %v102 = vadd.f32 %v74, %v100
    %s103 = sadd.s32 0, 0
    %s104 = smul.u32 %s103, 16
    %s105 = ssub.s32 16, %s104
    %p106 = scmp.ge.s32.totalorder %s105, 16
    // Predicated region
    $region22: #{tpu_custom_call.1} parent=1 // pred_check
      %p107 = pneg %p106
    $region23: #{tpu_custom_call.1} parent=1 // pred_check_branch
      %109 = sbr.rel (%p107) target = $region25
    $region24: #{tpu_custom_call.1} parent=1 // pred_region
      %v110 = vld [vmem:[#allocation7] sm:$0xff]
      %v111 = vadd.f32 %v101, 0.0
      %v112 = vadd.f32 %v102, 0.0
      %v113 = vadd.f32 %v111, %v112
      %v114 = vadd.f32 %v110, %v113
      %115 = vst [vmem:[#allocation7] sm:$0xff] %v114
    $region25: #{tpu_custom_call.1} parent=1 // pred_fallthru
      _
    %p116 = scmp.lt.s32.totalorder %s105, 16
    // Predicated region
    $region26: #{tpu_custom_call.1} parent=1 // pred_check
      %p117 = pneg %p116
    $region27: #{tpu_custom_call.1} parent=1 // pred_check_branch
      %119 = sbr.rel (%p117) target = $region29
    $region28: #{tpu_custom_call.1} parent=1 // pred_region
      %v120 = vlaneseq
      %v121 = vshrl.u32 %v120, 7
      %v122 = vadd.s32 %v121, 8
      %v123 = vstv %s105
      %vm124 = vcmp.lt.s32.totalorder %v121, %v123
      %vm125 = vcmp.lt.s32.totalorder %v122, %v123
      %v126 = vsel %vm124, %v101, 0.0
      %v127 = vsel %vm125, %v102, 0.0
      %v128 = vld [vmem:[#allocation7] sm:$0xff]
      %v129 = vadd.f32 %v126, 0.0
      %v130 = vadd.f32 %v127, 0.0
      %v131 = vadd.f32 %v129, %v130
      %v132 = vadd.f32 %v128, %v131
      %133 = vst [vmem:[#allocation7] sm:$0xff] %v132
    $region29: #{tpu_custom_call.1} parent=1 // pred_fallthru
      _
    // Predicated region
    $region30: #{tpu_custom_call.1} parent=1 // pred_check
      _
    $region31: #{tpu_custom_call.1} parent=1 // pred_check_branch
      %135 = sbr.rel (0) target = $region33
    $region32: #{tpu_custom_call.1} parent=1 // pred_region
      %s137 = ssub.s32 128, 128
      %138 = vsyncadd [#allocation4], %s137
      %s140 = sshll.u32 [#allocation7], 4
      %s141 = int_to_ptr.vmem [resolvable:$true] %s140
      %143 = dma.vmem_to_hbm [thread:$0]  %s141, 128, %s2, [#allocation4]
    $region33: #{tpu_custom_call.1} parent=1 // pred_fallthru
      _
    // Predicated region
    $region34: #{tpu_custom_call.1} parent=1 // pred_check
      _
    $region35: #{tpu_custom_call.1} parent=1 // pred_check_branch
      %145 = sbr.rel (0) target = $region37
    $region36: #{tpu_custom_call.1} parent=1 // pred_region
      %146 = dma.done [#allocation4], 128
    $region37: #{tpu_custom_call.1} parent=1 // pred_fallthru
      _
    %147 = vsyncpa [#allocation3], 1
    %148 = vsyncpa [#allocation6], 1
    %149 = vsyncpa [#allocation4], 1

</llo_original>
